<compile_context>
chip_gen: v5e
topology: v5e:2x2
jax: 0.10.0
libtpu: 0.0.40
codegen_flags: <defaults>
</compile_context>

<pallas_src>
import functools
import math

import jax
import jax.numpy as jnp
from jax.experimental import pallas as pl
from jax.experimental.pallas import tpu as pltpu


def _round_up(x, m):
    return ((x + m - 1) // m) * m


# ---------------------------------------------------------------------------
# Path A: whole weight stack resident in VMEM, in-kernel layer loop.
#   x_ref : (bt, Dpad)            f32   (one batch tile)
#   w_ref : (L, Dpad, Dpad)       bf16  (full stack, same block every step)
#   b_ref : (L, 1, Dpad)          f32   (full stack, same block every step)
#   o_ref : (bt, Dpad)            f32   (one batch tile)
# ---------------------------------------------------------------------------
def _mlp_resident_kernel(x_ref, w_ref, b_ref, o_ref, *, n_layers):
    # bf16 activation: exactly what the MXU consumes, half the vreg pressure.
    a = x_ref[...].astype(jnp.bfloat16)
    # n_layers is a small static hyperparameter -> static unroll gives the
    # scheduler visibility to overlap bias/ReLU of layer l with matmul l+1.
    for l in range(n_layers - 1):
        z = jnp.dot(a, w_ref[l], preferred_element_type=jnp.float32) + b_ref[l]
        a = jnp.maximum(z, 0.0).astype(jnp.bfloat16)
    z = jnp.dot(a, w_ref[n_layers - 1], preferred_element_type=jnp.float32)
    z = z + b_ref[n_layers - 1]
    # exp lowers to the otherwise-idle EUP; exact sigmoid kept for accuracy.
    o_ref[...] = jax.nn.sigmoid(z).astype(o_ref.dtype)


# ---------------------------------------------------------------------------
# Path B: streamed weights, one grid step per (batch tile, layer).
#   x_ref  : (bt, Dpad)        f32
#   w_ref  : (Dpad, Dpad)      bf16  (layer l, leading dim squeezed)
#   b_ref  : (1, Dpad)         f32   (layer l, leading dim squeezed)
#   o_ref  : (bt, Dpad)        f32   (written once, on the last layer step)
#   act_ref: (bt, Dpad)        bf16  VMEM scratch, resident across the layer axis
# ---------------------------------------------------------------------------
def _mlp_stream_kernel(x_ref, w_ref, b_ref, o_ref, act_ref):
    l = pl.program_id(1)
    n_layers = pl.num_programs(1)

    @pl.when(l == 0)
    def _():
        act_ref[...] = x_ref[...].astype(act_ref.dtype)

    z = jnp.dot(act_ref[...], w_ref[...], preferred_element_type=jnp.float32)
    z = z + b_ref[...]

    @pl.when(l < n_layers - 1)
    def _():
        act_ref[...] = jnp.maximum(z, 0.0).astype(act_ref.dtype)

    @pl.when(l == n_layers - 1)
    def _():
        o_ref[...] = jax.nn.sigmoid(z).astype(o_ref.dtype)


def prepare_stacked_params(params, d_pad):
    """Zero-pad every layer's W to (d_pad, d_pad) and bias to (1, d_pad), stack.

    Zero padding is exact: padded activation columns stay 0 through the hidden
    layers (0-weight columns, 0 bias, ReLU(0)=0), and padded output columns of
    the last (sigmoid) layer are sliced off. Weights stored in bf16 to halve
    the HBM->VMEM weight DMA.
    """
    w_stack, b_stack = [], []
    for w, b in params:
        d_in, d_out = w.shape
        w_p = jnp.zeros((d_pad, d_pad), jnp.float32).at[:d_in, :d_out].set(w)
        b_p = jnp.zeros((1, d_pad), jnp.float32).at[0, :d_out].set(b)
        w_stack.append(w_p.astype(jnp.bfloat16))
        b_stack.append(b_p)
    return jnp.stack(w_stack), jnp.stack(b_stack)


@functools.partial(jax.jit, static_argnames=("out_dim", "force_stream"))
def fused_mlp_forward(x, w_stack, b_stack, *, out_dim, force_stream=False):
    """Runs the whole MLP in a single Pallas kernel and slices back the result."""
    n_layers, d_pad, _ = w_stack.shape
    batch, in_dim = x.shape

    # bf16 resident activation -> pad batch to a multiple of 16 (sublane-dense).
    b_pad = _round_up(max(batch, 16), 16)
    if b_pad <= 256:
        bt = b_pad                      # single batch tile
    else:
        bt = 256                        # tile batch; "parallel" axis (v7x megacore)
        b_pad = _round_up(b_pad, bt)
    n_bt = b_pad // bt

    x_pad = jnp.zeros((b_pad, d_pad), jnp.float32)
    x_pad = x_pad.at[:batch, :in_dim].set(x.astype(jnp.float32))

    weight_bytes = w_stack.size * w_stack.dtype.itemsize
    bias_bytes = b_stack.size * b_stack.dtype.itemsize
    io_bytes = 2 * b_pad * d_pad * 4
    cost = pl.CostEstimate(
        flops=2 * n_layers * b_pad * d_pad * d_pad,
        transcendentals=b_pad * d_pad,  # sigmoid exp on the last layer
        bytes_accessed=weight_bytes + bias_bytes + io_bytes,
    )

    # VMEM budgeting (explicit guard; v7x has only 64 MiB physical).
    tile_io_vmem = 2 * (2 * bt * d_pad * 4)          # x + out, double-buffered
    stack_vmem = weight_bytes + bias_bytes           # whole stack resident
    resident_fits = (stack_vmem + tile_io_vmem) <= 40 * (1 << 20)

    if resident_fits and not force_stream:
        vmem_need = stack_vmem + tile_io_vmem
        vmem_limit = int(min(max(2 * vmem_need, 32 << 20), 64 << 20))
        out_pad = pl.pallas_call(
            functools.partial(_mlp_resident_kernel, n_layers=n_layers),
            out_shape=jax.ShapeDtypeStruct((b_pad, d_pad), jnp.float32),
            grid_spec=pltpu.PrefetchScalarGridSpec(
                num_scalar_prefetch=0,
                grid=(n_bt,),
                in_specs=[
                    pl.BlockSpec((bt, d_pad), lambda i: (i, 0)),            # x tile
                    pl.BlockSpec((n_layers, d_pad, d_pad),
                                 lambda i: (0, 0, 0)),                       # full W stack (resident)
                    pl.BlockSpec((n_layers, 1, d_pad), lambda i: (0, 0, 0)), # full bias stack
                ],
                out_specs=pl.BlockSpec((bt, d_pad), lambda i: (i, 0)),
            ),
            compiler_params=pltpu.CompilerParams(
                dimension_semantics=("parallel",),
                vmem_limit_bytes=vmem_limit,
            ),
            cost_estimate=cost,
        )(x_pad, w_stack, b_stack)
    else:
        # Streamed-weights fallback: layer axis innermost / "arbitrary" carries
        # the resident bf16 activation; Pallas double-buffers layer l+1's
        # weight DMA behind layer l's matmul.
        per_layer_w = d_pad * d_pad * w_stack.dtype.itemsize
        per_layer_b = d_pad * b_stack.dtype.itemsize
        vmem_need = 2 * (per_layer_w + per_layer_b) + tile_io_vmem + bt * d_pad * 2
        vmem_limit = int(min(max(2 * vmem_need, 32 << 20), 64 << 20))
        out_pad = pl.pallas_call(
            _mlp_stream_kernel,
            out_shape=jax.ShapeDtypeStruct((b_pad, d_pad), jnp.float32),
            grid_spec=pltpu.PrefetchScalarGridSpec(
                num_scalar_prefetch=0,
                grid=(n_bt, n_layers),
                in_specs=[
                    pl.BlockSpec((bt, d_pad), lambda bi, l: (bi, 0)),
                    pl.BlockSpec((pl.Squeezed(), d_pad, d_pad),
                                 lambda bi, l: (l, 0, 0)),
                    pl.BlockSpec((pl.Squeezed(), 1, d_pad),
                                 lambda bi, l: (l, 0, 0)),
                ],
                out_specs=pl.BlockSpec((bt, d_pad), lambda bi, l: (bi, 0)),
                scratch_shapes=[pltpu.VMEM((bt, d_pad), jnp.bfloat16)],
            ),
            compiler_params=pltpu.CompilerParams(
                dimension_semantics=("parallel", "arbitrary"),
                vmem_limit_bytes=vmem_limit,
            ),
            cost_estimate=cost,
        )(x_pad, w_stack, b_stack)

    return out_pad[:batch, :out_dim]


def xavier_uniform(key, fan_in, fan_out, dtype=jnp.float32):
    """Matches torch.nn.init.xavier_uniform_ (gain=1)."""
    limit = math.sqrt(6.0 / (fan_in + fan_out))
    # Sample in (out, in) order like PyTorch's weight, then transpose to (in, out).
    w_torch_layout = jax.random.uniform(
        key, (fan_out, fan_in), dtype=dtype, minval=-limit, maxval=limit
    )
    return w_torch_layout.T


def init_model_params(key, inp_dim, out_dim, n_hidden, n_layers):
    """Deterministic parameter init mirroring Model.__init__/reset_params."""
    layer_sizes = [n_hidden] * n_layers + [out_dim]
    params = []
    d_in = inp_dim
    for d_out in layer_sizes:
        key, sub = jax.random.split(key)
        w = xavier_uniform(sub, d_in, d_out)           # (d_in, d_out)
        bias = jnp.zeros((d_out,), dtype=jnp.float32)  # bias zeroed as in reset_params
        params.append((w, bias))
        d_in = d_out
    return params


if __name__ == "__main__":
    # Small shapes consistent with the module's forward (2-D input: batch x inp_dim).
    batch = 8
    inp_dim = 32
    n_hidden = 64
    out_dim = 16
    n_layers = 2

    key = jax.random.PRNGKey(0)
    key_params, key_x = jax.random.split(key)

    params = init_model_params(key_params, inp_dim, out_dim, n_hidden, n_layers)
    x = jax.random.normal(key_x, (batch, inp_dim), dtype=jnp.float32)

    dims = [inp_dim] + [w.shape[1] for w, _ in params]
    d_pad = _round_up(max(max(dims), 128), 128)  # lane-dense: multiple of 128
    w_stack, b_stack = prepare_stacked_params(params, d_pad)

    # Pure-f32 reference of the PyTorch forward (looser tolerance covers the
    # kernel's bf16 weight/activation quantization).
    a_f32 = x
    for i, (w, bias) in enumerate(params):
        z = a_f32 @ w + bias
        a_f32 = jnp.maximum(z, 0.0) if i < len(params) - 1 else jax.nn.sigmoid(z)

    for force_stream in (False, True):   # exercise both the resident and streamed paths
        out = fused_mlp_forward(
            x, w_stack, b_stack, out_dim=out_dim, force_stream=force_stream
        )
        out = jax.block_until_ready(out)
        assert out.shape == (batch, out_dim)
        err = float(jnp.max(jnp.abs(out - a_f32)))
        assert err < 1e-2, f"path(force_stream={force_stream}) max |err| = {err}"

    print("KERNEL_OK")
</pallas_src>

<mosaic_0001>
module attributes {stable_mosaic.version = 11 : i64} {
  func.func @_mlp_resident_kernel(%arg0: i32, %arg1: memref<16x128xf32, #tpu.memory_space<vmem>>, %arg2: memref<3x128x128xbf16, #tpu.memory_space<vmem>>, %arg3: memref<3x1x128xf32, #tpu.memory_space<vmem>>, %arg4: memref<16x128xf32, #tpu.memory_space<vmem>>) attributes {dimension_semantics = [#tpu.dimension_semantics<parallel>], iteration_bounds = array<i64: 1>, scalar_prefetch = 0 : i64, scratch_operands = 0 : i64, tpu.core_type = #tpu.core_type<tc>, window_params = [{transform_indices = @transform_0, window_bounds = array<i64: 16, 128>}, {pipeline_mode = #tpu.pipeline_mode<synchronous>, transform_indices = @transform_1, window_bounds = array<i64: 3, 128, 128>}, {pipeline_mode = #tpu.pipeline_mode<synchronous>, transform_indices = @transform_2, window_bounds = array<i64: 3, 1, 128>}, {transform_indices = @transform_3, window_bounds = array<i64: 16, 128>}]} {
    %c0 = arith.constant 0 : index
    %c0_0 = arith.constant 0 : index
    %0 = vector.load %arg1[%c0, %c0_0] : memref<16x128xf32, #tpu.memory_space<vmem>>, vector<16x128xf32>
    %1 = arith.truncf %0 : vector<16x128xf32> to vector<16x128xbf16>
    %c0_1 = arith.constant 0 : index
    %c0_2 = arith.constant 0 : index
    %c0_3 = arith.constant 0 : index
    %2 = vector.load %arg2[%c0_1, %c0_2, %c0_3] : memref<3x128x128xbf16, #tpu.memory_space<vmem>>, vector<1x128x128xbf16>
    %3 = vector.shape_cast %2 : vector<1x128x128xbf16> to vector<128x128xbf16>
    %cst = arith.constant dense<0.000000e+00> : vector<16x128xf32>
    %4 = tpu.matmul %1, %3, %cst {dimension_numbers = #tpu.dot_dimension_numbers<[1], [0], [0], [1], [0, 0, 1, 1], [], []>} : vector<16x128xbf16>, vector<128x128xbf16>, vector<16x128xf32> -> vector<16x128xf32>
    %c0_4 = arith.constant 0 : index
    %c0_5 = arith.constant 0 : index
    %c0_6 = arith.constant 0 : index
    %5 = vector.load %arg3[%c0_4, %c0_5, %c0_6] : memref<3x1x128xf32, #tpu.memory_space<vmem>>, vector<1x1x128xf32>
    %6 = vector.shape_cast %5 : vector<1x1x128xf32> to vector<1x128xf32>
    %7 = vector.broadcast %6 : vector<1x128xf32> to vector<16x128xf32>
    %8 = arith.addf %4, %7 : vector<16x128xf32>
    %cst_7 = arith.constant 0.000000e+00 : f32
    %9 = vector.broadcast %cst_7 : f32 to vector<16x128xf32>
    %10 = arith.maximumf %8, %9 : vector<16x128xf32>
    %11 = arith.truncf %10 : vector<16x128xf32> to vector<16x128xbf16>
    %c1 = arith.constant 1 : index
    %c0_8 = arith.constant 0 : index
    %c0_9 = arith.constant 0 : index
    %12 = vector.load %arg2[%c1, %c0_8, %c0_9] : memref<3x128x128xbf16, #tpu.memory_space<vmem>>, vector<1x128x128xbf16>
    %13 = vector.shape_cast %12 : vector<1x128x128xbf16> to vector<128x128xbf16>
    %cst_10 = arith.constant dense<0.000000e+00> : vector<16x128xf32>
    %14 = tpu.matmul %11, %13, %cst_10 {dimension_numbers = #tpu.dot_dimension_numbers<[1], [0], [0], [1], [0, 0, 1, 1], [], []>} : vector<16x128xbf16>, vector<128x128xbf16>, vector<16x128xf32> -> vector<16x128xf32>
    %c1_11 = arith.constant 1 : index
    %c0_12 = arith.constant 0 : index
    %c0_13 = arith.constant 0 : index
    %15 = vector.load %arg3[%c1_11, %c0_12, %c0_13] : memref<3x1x128xf32, #tpu.memory_space<vmem>>, vector<1x1x128xf32>
    %16 = vector.shape_cast %15 : vector<1x1x128xf32> to vector<1x128xf32>
    %17 = vector.broadcast %16 : vector<1x128xf32> to vector<16x128xf32>
    %18 = arith.addf %14, %17 : vector<16x128xf32>
    %cst_14 = arith.constant 0.000000e+00 : f32
    %19 = vector.broadcast %cst_14 : f32 to vector<16x128xf32>
    %20 = arith.maximumf %18, %19 : vector<16x128xf32>
    %21 = arith.truncf %20 : vector<16x128xf32> to vector<16x128xbf16>
    %c2 = arith.constant 2 : index
    %c0_15 = arith.constant 0 : index
    %c0_16 = arith.constant 0 : index
    %22 = vector.load %arg2[%c2, %c0_15, %c0_16] : memref<3x128x128xbf16, #tpu.memory_space<vmem>>, vector<1x128x128xbf16>
    %23 = vector.shape_cast %22 : vector<1x128x128xbf16> to vector<128x128xbf16>
    %cst_17 = arith.constant dense<0.000000e+00> : vector<16x128xf32>
    %24 = tpu.matmul %21, %23, %cst_17 {dimension_numbers = #tpu.dot_dimension_numbers<[1], [0], [0], [1], [0, 0, 1, 1], [], []>} : vector<16x128xbf16>, vector<128x128xbf16>, vector<16x128xf32> -> vector<16x128xf32>
    %c2_18 = arith.constant 2 : index
    %c0_19 = arith.constant 0 : index
    %c0_20 = arith.constant 0 : index
    %25 = vector.load %arg3[%c2_18, %c0_19, %c0_20] : memref<3x1x128xf32, #tpu.memory_space<vmem>>, vector<1x1x128xf32>
    %26 = vector.shape_cast %25 : vector<1x1x128xf32> to vector<1x128xf32>
    %27 = vector.broadcast %26 : vector<1x128xf32> to vector<16x128xf32>
    %28 = arith.addf %24, %27 : vector<16x128xf32>
    %29 = arith.negf %28 : vector<16x128xf32>
    %30 = math.exp %29 : vector<16x128xf32>
    %cst_21 = arith.constant 1.000000e+00 : f32
    %31 = vector.broadcast %cst_21 : f32 to vector<16x128xf32>
    %32 = arith.addf %31, %30 : vector<16x128xf32>
    %33 = arith.divf %31, %32 : vector<16x128xf32>
    %c0_22 = arith.constant 0 : index
    %c0_23 = arith.constant 0 : index
    %34 = vector.load %arg4[%c0_22, %c0_23] : memref<16x128xf32, #tpu.memory_space<vmem>>, vector<16x128xf32>
    tpu.vector_store %arg4[%c0_22, %c0_23], %33 {strides = array<i32>} : memref<16x128xf32, #tpu.memory_space<vmem>>, vector<16x128xf32>,
    return
  }
  func.func @transform_0(%arg0: i32) -> (i32, i32) {
    %c0_i32 = arith.constant 0 : i32
    %c0_i32_0 = arith.constant 0 : i32
    return %arg0, %c0_i32 : i32, i32
  }
  func.func @transform_1(%arg0: i32) -> (i32, i32, i32) {
    %c0_i32 = arith.constant 0 : i32
    %c0_i32_0 = arith.constant 0 : i32
    %c0_i32_1 = arith.constant 0 : i32
    %c0_i32_2 = arith.constant 0 : i32
    return %c0_i32, %c0_i32_0, %c0_i32_1 : i32, i32, i32
  }
  func.func @transform_2(%arg0: i32) -> (i32, i32, i32) {
    %c0_i32 = arith.constant 0 : i32
    %c0_i32_0 = arith.constant 0 : i32
    %c0_i32_1 = arith.constant 0 : i32
    %c0_i32_2 = arith.constant 0 : i32
    return %c0_i32, %c0_i32_0, %c0_i32_1 : i32, i32, i32
  }
  func.func @transform_3(%arg0: i32) -> (i32, i32) {
    %c0_i32 = arith.constant 0 : i32
    %c0_i32_0 = arith.constant 0 : i32
    return %arg0, %c0_i32 : i32, i32
  }
}

</mosaic_0001>

<llo_original>
// kernel: fused_mlp_forward.1
$region0: #{fused_mlp_forward.1}
  #allocation0 [shape = 'u32[]', space=smem, size = 0x4, offset = 0x4, fixed_abs, tag = 'smem constant byte address 0x4 - core index']
  #allocation1 [shape = 'u32[72,128]{1,0:T(1,128)}', space=vmem, size = 0x9000, scoped, tag = 'internal scratch']
  %s0 = inlined_call_operand.vmem [shape: f32[16,128], index: 0, kind: input, shape index: {}]
  %s1 = inlined_call_operand.hbm [shape: bf16[3,128,128], index: 1, kind: input, shape index: {}]
  %s2 = inlined_call_operand.vmem [shape: f32[3,1,128], index: 2, kind: input, shape index: {}]
  %s3 = inlined_call_operand.vmem [shape: f32[16,128], index: 3, kind: output, shape index: {}]
  %s4 = sld [smem:[#allocation0]]
  $region26: #{fused_mlp_forward.1} parent=0
    _
  %s6 = ssub.s32 1, %s4
  %s7 = scalar_select 0, %s6, %s4
  $region1: #{fused_mlp_forward.1} parent=0
    #allocation2 [shape = 'u8[98304]{0}', space=vmem, size = 0x18000, scoped, tag = 'input window, operand 1, single buffered']
    #allocation3 [shape = 's32[1]{0}', space=sflag, size = 0x4, scoped, tag = 'scoped memory for fused_mlp_forward.1']
    %8 = vsyncpa [#allocation3], 0
    // Predicated region
    $region2: #{fused_mlp_forward.1} parent=1 // pred_check
      _
    $region3: #{fused_mlp_forward.1} parent=1 // pred_check_branch
      %10 = sbr.rel (0) target = $region5
    $region4: #{fused_mlp_forward.1} parent=1 // pred_region
      _
    $region5: #{fused_mlp_forward.1} parent=1 // pred_fallthru
      _
    // Predicated region
    $region6: #{fused_mlp_forward.1} parent=1 // pred_check
      _
    $region7: #{fused_mlp_forward.1} parent=1 // pred_check_branch
      %12 = sbr.rel (0) target = $region9
    $region8: #{fused_mlp_forward.1} parent=1 // pred_region
      %14 = vsyncadd [#allocation3], 0
      %s15 = sshll.u32 %s1, 4
      %s16 = int_to_ptr.hbm [resolvable:$true] %s15
      %s17 = sshll.u32 [#allocation2], 4
      %s18 = int_to_ptr.vmem [resolvable:$true] %s17
      %23 = dma.hbm_to_vmem [thread:$0]  %s16, 3072, %s18, [#allocation3], 64, 64, 4
    $region9: #{fused_mlp_forward.1} parent=1 // pred_fallthru
      _
    // Predicated region
    $region10: #{fused_mlp_forward.1} parent=1 // pred_check
      _
    $region11: #{fused_mlp_forward.1} parent=1 // pred_check_branch
      %25 = sbr.rel (0) target = $region13
    $region12: #{fused_mlp_forward.1} parent=1 // pred_region
      _
    $region13: #{fused_mlp_forward.1} parent=1 // pred_fallthru
      _
    // Predicated region
    $region14: #{fused_mlp_forward.1} parent=1 // pred_check
      _
    $region15: #{fused_mlp_forward.1} parent=1 // pred_check_branch
      %27 = sbr.rel (0) target = $region17
    $region16: #{fused_mlp_forward.1} parent=1 // pred_region
      %29 = dma.done [#allocation3], 3072
    $region17: #{fused_mlp_forward.1} parent=1 // pred_fallthru
      _
    %v30 = vld [vmem:[%s0] sm:$0xff]
    %v31 = vld [vmem:[%s0 + $0x8] sm:$0xff]
    %v32 = vpack.c.bf16 %v31, %v30
    %v33 = vld [vmem:[#allocation2] sm:$0xf]
    %v34 = vld [vmem:[#allocation2 + $0x4] sm:$0xf]
    %v35 = vld [vmem:[#allocation2 + $0x8] sm:$0xf]
    %v36 = vld [vmem:[#allocation2 + $0xc] sm:$0xf]
    %v37 = vld [vmem:[#allocation2 + $0x10] sm:$0xf]
    %v38 = vld [vmem:[#allocation2 + $0x14] sm:$0xf]
    %v39 = vld [vmem:[#allocation2 + $0x18] sm:$0xf]
    %v40 = vld [vmem:[#allocation2 + $0x1c] sm:$0xf]
    %v41 = vld [vmem:[#allocation2 + $0x20] sm:$0xf]
    %v42 = vld [vmem:[#allocation2 + $0x24] sm:$0xf]
    %v43 = vld [vmem:[#allocation2 + $0x28] sm:$0xf]
    %v44 = vld [vmem:[#allocation2 + $0x2c] sm:$0xf]
    %v45 = vld [vmem:[#allocation2 + $0x30] sm:$0xf]
    %v46 = vld [vmem:[#allocation2 + $0x34] sm:$0xf]
    %v47 = vld [vmem:[#allocation2 + $0x38] sm:$0xf]
    %v48 = vld [vmem:[#allocation2 + $0x3c] sm:$0xf]
    %v49 = vld [vmem:[%s2] sm:$0x1]
    %v51 = vperm.slane %v49, 0
    %v69 = vunpack.c.l.b16 %v33
    %v70 = vunpack.c.l.b16 %v34
    %v71 = vunpack.c.l.b16 %v35
    %v72 = vunpack.c.l.b16 %v36
    %v73 = vunpack.c.l.b16 %v37
    %v74 = vunpack.c.l.b16 %v38
    %v75 = vunpack.c.l.b16 %v39
    %v76 = vunpack.c.l.b16 %v40
    %v77 = vunpack.c.l.b16 %v41
    %v78 = vunpack.c.l.b16 %v42
    %v79 = vunpack.c.l.b16 %v43
    %v80 = vunpack.c.l.b16 %v44
    %v81 = vunpack.c.l.b16 %v45
    %v82 = vunpack.c.l.b16 %v46
    %v83 = vunpack.c.l.b16 %v47
    %v84 = vunpack.c.l.b16 %v48
    %v85 = vpack.c.b16 %v70, %v69
    %v86 = vpack.c.b16 %v72, %v71
    %v87 = vpack.c.b16 %v74, %v73
    %v88 = vpack.c.b16 %v76, %v75
    %v89 = vpack.c.b16 %v78, %v77
    %v90 = vpack.c.b16 %v80, %v79
    %v91 = vpack.c.b16 %v82, %v81
    %v92 = vpack.c.b16 %v84, %v83
    %101 = vmatpush.bf16.msra.mxu0 %v92
    %102 = vmatpush.bf16.msra.mxu0 %v91
    %103 = vmatpush.bf16.msra.mxu0 %v90
    %104 = vmatpush.bf16.msra.mxu0 %v89
    %105 = vmatpush.bf16.msra.mxu0 %v88
    %106 = vmatpush.bf16.msra.mxu0 %v87
    %107 = vmatpush.bf16.msra.mxu0 %v86
    %108 = vmatpush.bf16.msra.mxu0 %v85
    %109 = vmatmul.bf16.gmra.mxu0 %v32
    %v110 = vpop.f32.mrf.mxu0
    %v111 = vadd.f32 %v51, %v110
    %v112 = vpop.f32.mrf.mxu0
    %v113 = vadd.f32 %v51, %v112
    %114 = vdwg.mxu0
    %v115 = vmax.f32 %v111, 0.0
    %v116 = vmax.f32 %v113, 0.0
    %v117 = vpack.c.bf16 %v116, %v115
    %s118 = scalar_lea.vmem [#allocation2], 64
    %v119 = vld [vmem:[%s118] sm:$0xf]
    %v120 = vld [vmem:[%s118 + $0x4] sm:$0xf]
    %v121 = vld [vmem:[%s118 + $0x8] sm:$0xf]
    %v122 = vld [vmem:[%s118 + $0xc] sm:$0xf]
    %v123 = vld [vmem:[%s118 + $0x10] sm:$0xf]
    %v124 = vld [vmem:[%s118 + $0x14] sm:$0xf]
    %v125 = vld [vmem:[%s118 + $0x18] sm:$0xf]
    %v126 = vld [vmem:[%s118 + $0x1c] sm:$0xf]
    %v127 = vld [vmem:[%s118 + $0x20] sm:$0xf]
    %v128 = vld [vmem:[%s118 + $0x24] sm:$0xf]
    %v129 = vld [vmem:[%s118 + $0x28] sm:$0xf]
    %v130 = vld [vmem:[%s118 + $0x2c] sm:$0xf]
    %v131 = vld [vmem:[%s118 + $0x30] sm:$0xf]
    %v132 = vld [vmem:[%s118 + $0x34] sm:$0xf]
    %v133 = vld [vmem:[%s118 + $0x38] sm:$0xf]
    %v134 = vld [vmem:[%s118 + $0x3c] sm:$0xf]
    %s135 = scalar_lea.vmem %s2, 1
    %v136 = vld [vmem:[%s135] sm:$0x1]
    %v138 = vperm.slane %v136, 0
    %v156 = vunpack.c.l.b16 %v119
    %v157 = vunpack.c.l.b16 %v120
    %v158 = vunpack.c.l.b16 %v121
    %v159 = vunpack.c.l.b16 %v122
    %v160 = vunpack.c.l.b16 %v123
    %v161 = vunpack.c.l.b16 %v124
    %v162 = vunpack.c.l.b16 %v125
    %v163 = vunpack.c.l.b16 %v126
    %v164 = vunpack.c.l.b16 %v127
    %v165 = vunpack.c.l.b16 %v128
    %v166 = vunpack.c.l.b16 %v129
    %v167 = vunpack.c.l.b16 %v130
    %v168 = vunpack.c.l.b16 %v131
    %v169 = vunpack.c.l.b16 %v132
    %v170 = vunpack.c.l.b16 %v133
    %v171 = vunpack.c.l.b16 %v134
    %v172 = vpack.c.b16 %v157, %v156
    %v173 = vpack.c.b16 %v159, %v158
    %v174 = vpack.c.b16 %v161, %v160
    %v175 = vpack.c.b16 %v163, %v162
    %v176 = vpack.c.b16 %v165, %v164
    %v177 = vpack.c.b16 %v167, %v166
    %v178 = vpack.c.b16 %v169, %v168
    %v179 = vpack.c.b16 %v171, %v170
    %188 = vmatpush.bf16.msra.mxu0 %v179
    %189 = vmatpush.bf16.msra.mxu0 %v178
    %190 = vmatpush.bf16.msra.mxu0 %v177
    %191 = vmatpush.bf16.msra.mxu0 %v176
    %192 = vmatpush.bf16.msra.mxu0 %v175
    %193 = vmatpush.bf16.msra.mxu0 %v174
    %194 = vmatpush.bf16.msra.mxu0 %v173
    %195 = vmatpush.bf16.msra.mxu0 %v172
    %196 = vmatmul.bf16.gmra.mxu0 %v117
    %v197 = vpop.f32.mrf.mxu0
    %v198 = vadd.f32 %v138, %v197
    %v199 = vpop.f32.mrf.mxu0
    %v200 = vadd.f32 %v138, %v199
    %201 = vdwg.mxu0
    %v202 = vmax.f32 %v198, 0.0
    %v203 = vmax.f32 %v200, 0.0
    %v204 = vpack.c.bf16 %v203, %v202
    %s205 = scalar_lea.vmem [#allocation2], 128
    %v206 = vld [vmem:[%s205] sm:$0xf]
    %v207 = vld [vmem:[%s205 + $0x4] sm:$0xf]
    %v208 = vld [vmem:[%s205 + $0x8] sm:$0xf]
    %v209 = vld [vmem:[%s205 + $0xc] sm:$0xf]
    %v210 = vld [vmem:[%s205 + $0x10] sm:$0xf]
    %v211 = vld [vmem:[%s205 + $0x14] sm:$0xf]
    %v212 = vld [vmem:[%s205 + $0x18] sm:$0xf]
    %v213 = vld [vmem:[%s205 + $0x1c] sm:$0xf]
    %v214 = vld [vmem:[%s205 + $0x20] sm:$0xf]
    %v215 = vld [vmem:[%s205 + $0x24] sm:$0xf]
    %v216 = vld [vmem:[%s205 + $0x28] sm:$0xf]
    %v217 = vld [vmem:[%s205 + $0x2c] sm:$0xf]
    %v218 = vld [vmem:[%s205 + $0x30] sm:$0xf]
    %v219 = vld [vmem:[%s205 + $0x34] sm:$0xf]
    %v220 = vld [vmem:[%s205 + $0x38] sm:$0xf]
    %v221 = vld [vmem:[%s205 + $0x3c] sm:$0xf]
    %s222 = scalar_lea.vmem %s2, 2
    %v223 = vld [vmem:[%s222] sm:$0x1]
    %v225 = vperm.slane %v223, 0
    %v243 = vunpack.c.l.b16 %v206
    %v244 = vunpack.c.l.b16 %v207
    %v245 = vunpack.c.l.b16 %v208
    %v246 = vunpack.c.l.b16 %v209
    %v247 = vunpack.c.l.b16 %v210
    %v248 = vunpack.c.l.b16 %v211
    %v249 = vunpack.c.l.b16 %v212
    %v250 = vunpack.c.l.b16 %v213
    %v251 = vunpack.c.l.b16 %v214
    %v252 = vunpack.c.l.b16 %v215
    %v253 = vunpack.c.l.b16 %v216
    %v254 = vunpack.c.l.b16 %v217
    %v255 = vunpack.c.l.b16 %v218
    %v256 = vunpack.c.l.b16 %v219
    %v257 = vunpack.c.l.b16 %v220
    %v258 = vunpack.c.l.b16 %v221
    %v259 = vpack.c.b16 %v244, %v243
    %v260 = vpack.c.b16 %v246, %v245
    %v261 = vpack.c.b16 %v248, %v247
    %v262 = vpack.c.b16 %v250, %v249
    %v263 = vpack.c.b16 %v252, %v251
    %v264 = vpack.c.b16 %v254, %v253
    %v265 = vpack.c.b16 %v256, %v255
    %v266 = vpack.c.b16 %v258, %v257
    %275 = vmatpush.bf16.msra.mxu0 %v266
    %276 = vmatpush.bf16.msra.mxu0 %v265
    %277 = vmatpush.bf16.msra.mxu0 %v264
    %278 = vmatpush.bf16.msra.mxu0 %v263
    %279 = vmatpush.bf16.msra.mxu0 %v262
    %280 = vmatpush.bf16.msra.mxu0 %v261
    %281 = vmatpush.bf16.msra.mxu0 %v260
    %282 = vmatpush.bf16.msra.mxu0 %v259
    %283 = vmatmul.bf16.gmra.mxu0 %v204
    %v284 = vpop.f32.mrf.mxu0
    %v285 = vadd.f32 %v225, %v284
    %v286 = vpop.f32.mrf.mxu0
    %v287 = vadd.f32 %v225, %v286
    %288 = vdwg.mxu0
    %v289 = vxor.u32 %v285, 2147483648
    %v290 = vxor.u32 %v287, 2147483648
    %v291 = vmul.f32 %v289, 1.442695
    %v292 = vpow.pop %v291
    %v293 = vmul.f32 %v290, 1.442695
    %v294 = vpow.pop %v293
    %v295 = vadd.f32 %v292, 1.0
    %v296 = vadd.f32 %v294, 1.0
    %v297 = vrcp.pop %v295
    %v298 = vmul.f32 %v295, %v297
    %v299 = vsub.f32 1.0, %v298
    %v300 = vmul.f32 %v297, %v299
    %v301 = vadd.f32 %v297, %v300
    %vm302 = vweird.f32 %v295
    %vm303 = vweird.f32 %v297
    %vm304 = vmor %vm302, %vm303
    %v305 = vsel %vm304, %v297, %v301
    %v306 = vand.u32 2147483647, %v295
    %vm307 = vcmp.eq.f32.partialorder %v306, 8.507059e+37
    %v308 = vand.u32 %v295, 2147483648
    %v309 = vor.u32 1.1754944e-38, %v308
    %v310 = vsel %vm307, %v309, %v305
    %v311 = vmul.f32 1.0, %v310
    %v312 = vrcp.pop %v296
    %v313 = vmul.f32 %v296, %v312
    %v314 = vsub.f32 1.0, %v313
    %v315 = vmul.f32 %v312, %v314
    %v316 = vadd.f32 %v312, %v315
    %vm317 = vweird.f32 %v296
    %vm318 = vweird.f32 %v312
    %vm319 = vmor %vm317, %vm318
    %v320 = vsel %vm319, %v312, %v316
    %v321 = vand.u32 2147483647, %v296
    %vm322 = vcmp.eq.f32.partialorder %v321, 8.507059e+37
    %v323 = vand.u32 %v296, 2147483648
    %v324 = vor.u32 1.1754944e-38, %v323
    %v325 = vsel %vm322, %v324, %v320
    %v326 = vmul.f32 1.0, %v325
    %327 = vst [vmem:[%s3] sm:$0xff] %v311
    %328 = vst [vmem:[%s3 + $0x8] sm:$0xff] %v326
    // Predicated region
    $region18: #{fused_mlp_forward.1} parent=1 // pred_check
      _
    $region19: #{fused_mlp_forward.1} parent=1 // pred_check_branch
      %330 = sbr.rel (0) target = $region21
    $region20: #{fused_mlp_forward.1} parent=1 // pred_region
      _
    $region21: #{fused_mlp_forward.1} parent=1 // pred_fallthru
      _
    // Predicated region
    $region22: #{fused_mlp_forward.1} parent=1 // pred_check
      _
    $region23: #{fused_mlp_forward.1} parent=1 // pred_check_branch
      %332 = sbr.rel (0) target = $region25
    $region24: #{fused_mlp_forward.1} parent=1 // pred_region
      _
    $region25: #{fused_mlp_forward.1} parent=1 // pred_fallthru
      _
    %333 = vsyncpa [#allocation3], 1

</llo_original>
